<compile_context>
chip_gen: v6e
topology: v6e:2x2x1
jax: 0.10.0
libtpu: 0.0.40
codegen_flags: <defaults>
</compile_context>

<pallas_src>
import jax
import jax.numpy as jnp
import numpy as np
from jax.experimental import pallas as pl
from jax.experimental.pallas import tpu as pltpu


# --------------------------------------------------------------------------
# Kernel: one (i-tile, j-tile) block of the fused pairwise transform.
# --------------------------------------------------------------------------
def _rel_trafo_mm_kernel(a_ref, b_ref, o_ref):
    # a_ref: [1, TI, 16]      frame-i factors
    # b_ref: [1, 16, TJ*16]   frame-j factors, already in the interleaved
    #                         (j-major, component-minor) output lane layout
    # o_ref: [1, TI, TJ*16]   out[i, 16*j + (4a+c)] = (T_i^{-1} T_j)[a, c]
    acc = jnp.dot(a_ref[0], b_ref[0], preferred_element_type=jnp.float32)
    o_ref[0] = acc.astype(o_ref.dtype)


# --------------------------------------------------------------------------
# Wrapper-side factor construction (O(N) work, negligible vs. O(N^2) output).
# --------------------------------------------------------------------------
_ROT_IDX = (0, 1, 2, 4, 5, 6, 8, 9, 10)   # m = 3k+a  ->  flat T index 4k+a
_TRA_IDX = (3, 7, 11)                     # k         ->  flat T index 4k+3


def _build_factors(Tf):
    """Build A [B,N,16] and Bf [B,16,N*16] with out = A @ Bf (see header)."""
    Bb, N = Tf.shape[0], Tf.shape[1]
    f32 = jnp.float32

    rot = Tf[:, :, jnp.array(_ROT_IDX)]                  # [B,N,9]  R_i[k,a] at m=3k+a
    tra = Tf[:, :, jnp.array(_TRA_IDX)]                  # [B,N,3]  t_i[k]
    # s_a(i) = sum_k R_i[k,a] * t_i[k]   (exact elementwise, no dot)
    s = jnp.sum(rot.reshape(Bb, N, 3, 3) * tra[..., :, None], axis=-2)   # [B,N,3]
    A = jnp.concatenate(
        [rot, -s, jnp.ones((Bb, N, 1), f32), jnp.zeros((Bb, N, 3), f32)], axis=-1)

    Bf = jnp.zeros((Bb, 16, N, 16), f32)
    for k in range(3):
        for a in range(3):
            # Bf[3k+a, j, 4a + c'] = T_j[k, c'],  c' = 0..3  (rotation + t_j)
            Bf = Bf.at[:, 3 * k + a, :, 4 * a:4 * a + 4].set(
                Tf[:, :, 4 * k:4 * k + 4])
    for a in range(3):
        Bf = Bf.at[:, 9 + a, :, 4 * a + 3].set(1.0)      # pairs with A[..., 9+a] = -s_a
    Bf = Bf.at[:, 12, :, 15].set(1.0)                    # homogeneous 1 (A[..., 12] = 1)
    return A, Bf.reshape(Bb, 16, N * 16)


def _pick_tile(n, target, multiple):
    """Largest tile <= target that is a multiple of `multiple` and divides n.

    Falls back to the full extent n (legal: block dim == full array dim) when
    n is not a multiple of `multiple`.
    """
    if n % multiple != 0:
        return n
    t = max((min(target, n) // multiple) * multiple, multiple)
    while n % t != 0:
        t -= multiple
    return t


# --------------------------------------------------------------------------
# Public entry point: out[b, i, j] = T[b, i]^{-1} @ T[b, j], [B, N, N, 4, 4].
# --------------------------------------------------------------------------
def relative_global_frame_transformation(T, *, ti_target=256, tj_target=512,
                                          out_dtype=jnp.float32,
                                          block_budget_bytes=8 * 1024 * 1024):
    B, N = T.shape[0], T.shape[1]
    Tf = T.reshape(B, N, 16).astype(jnp.float32)
    A, Bf = _build_factors(Tf)

    out_itemsize = jnp.dtype(out_dtype).itemsize
    # bf16 output packs 16 rows per vreg sublane group -> keep stores unmasked.
    sub_mult = 8 if out_itemsize >= 4 else 16

    # VMEM-budgeted, lane-biased tile choice.  Output block = TI x (TJ*16).
    budget_elems = max(block_budget_bytes // (16 * out_itemsize), 64)
    tj = _pick_tile(N, min(tj_target, max(budget_elems // sub_mult, 8)), 8)
    ti = _pick_tile(N, min(ti_target, max(budget_elems // tj, sub_mult)), sub_mult)

    # v7x has two TensorCores: make sure the parallel grid has extent >= 2.
    while (B * (N // ti) * (N // tj) < 2
           and ti % (2 * sub_mult) == 0 and N % (ti // 2) == 0):
        ti //= 2

    # Grid order (batch, j, i): the (16, TJ*16) frame-j factor block is only
    # re-fetched once per j tile; the tiny (TI, 16) A block changes per step.
    grid = (B, N // tj, N // ti)

    out_blk = ti * tj * 16 * out_itemsize
    b_blk = 16 * tj * 16 * 4
    a_blk = ti * 16 * 4
    vmem_limit = min(max(2 * (out_blk + b_blk + a_blk) + (4 << 20), 16 << 20),
                     64 << 20)

    out = pl.pallas_call(
        _rel_trafo_mm_kernel,
        out_shape=jax.ShapeDtypeStruct((B, N, N * 16), out_dtype),
        grid=grid,
        in_specs=[
            pl.BlockSpec((1, ti, 16), lambda b, j, i: (b, i, 0)),
            pl.BlockSpec((1, 16, tj * 16), lambda b, j, i: (b, 0, j)),
        ],
        out_specs=pl.BlockSpec((1, ti, tj * 16), lambda b, j, i: (b, i, j)),
        compiler_params=pltpu.CompilerParams(
            dimension_semantics=("parallel", "parallel", "parallel"),
            vmem_limit_bytes=vmem_limit,
        ),
    )(A, Bf)

    # [B, N, N*16] -> [B, N, N, 4, 4]: splitting trailing contiguous dims is a
    # metadata-only reshape -- no transpose, no extra HBM round-trip.
    return out.reshape(B, N, N, 4, 4)


# --------------------------------------------------------------------------
# Pure-JAX reference (exact f32 elementwise ops, no matmul-precision issues).
# --------------------------------------------------------------------------
def _reference(T):
    R = T[..., :3, :3]                                     # [B,N,3,3]
    t = T[..., :3, 3]                                      # [B,N,3]
    Rrel = jnp.sum(R[:, :, None, :, :, None] * R[:, None, :, :, None, :],
                   axis=3)                                 # [B,i,j,a,c]
    dt = t[:, None, :, :] - t[:, :, None, :]               # t_j - t_i  [B,i,j,k]
    trel = jnp.sum(R[:, :, None, :, :] * dt[..., None], axis=3)   # [B,i,j,a]
    B, N = T.shape[0], T.shape[1]
    out = jnp.zeros((B, N, N, 4, 4), jnp.float32)
    out = out.at[..., :3, :3].set(Rrel)
    out = out.at[..., :3, 3].set(trel)
    out = out.at[..., 3, 3].set(1.0)
    return out


def _random_rigid_frames(key, B, N):
    kq, kt = jax.random.split(key)
    q = jax.random.normal(kq, (B, N, 4), dtype=jnp.float32)
    q = q / jnp.linalg.norm(q, axis=-1, keepdims=True)
    w, x, y, z = q[..., 0], q[..., 1], q[..., 2], q[..., 3]
    R = jnp.stack([
        1 - 2 * (y * y + z * z), 2 * (x * y - w * z), 2 * (x * z + w * y),
        2 * (x * y + w * z), 1 - 2 * (x * x + z * z), 2 * (y * z - w * x),
        2 * (x * z - w * y), 2 * (y * z + w * x), 1 - 2 * (x * x + y * y),
    ], axis=-1).reshape(B, N, 3, 3)
    t = jax.random.normal(kt, (B, N, 3), dtype=jnp.float32)
    T = jnp.zeros((B, N, 4, 4), jnp.float32)
    T = T.at[..., :3, :3].set(R)
    T = T.at[..., :3, 3].set(t)
    T = T.at[..., 3, 3].set(1.0)
    return T


if __name__ == "__main__":
    key = jax.random.PRNGKey(0)

    # Small shape consistent with the module (single-j-block path).
    B, N = 2, 16
    T = _random_rigid_frames(key, B, N)                    # [2, 16, 4, 4]
    out = jax.block_until_ready(relative_global_frame_transformation(T))
    ref = _reference(T)
    np.testing.assert_allclose(np.asarray(out), np.asarray(ref),
                               rtol=1e-5, atol=1e-5)

    # Exercise the multi-tile grid path (several i/j tiles, f32 output).
    T2 = _random_rigid_frames(jax.random.PRNGKey(1), 1, 256)   # [1, 256, 4, 4]
    out2 = jax.block_until_ready(
        relative_global_frame_transformation(T2, ti_target=64, tj_target=128))
    ref2 = _reference(T2)
    np.testing.assert_allclose(np.asarray(out2), np.asarray(ref2),
                               rtol=1e-5, atol=1e-5)

    # Exercise the optional bf16-output path (halves HBM write traffic).
    out_bf16 = jax.block_until_ready(
        relative_global_frame_transformation(T, out_dtype=jnp.bfloat16))
    np.testing.assert_allclose(np.asarray(out_bf16).astype(np.float32),
                               np.asarray(ref), rtol=2e-2, atol=5e-2)

    print("KERNEL_OK")
</pallas_src>

<mosaic_0001>
module attributes {stable_mosaic.version = 11 : i64} {
  func.func @_rel_trafo_mm_kernel(%arg0: i32, %arg1: i32, %arg2: i32, %arg3: memref<1x16x16xf32, #tpu.memory_space<vmem>>, %arg4: memref<1x16x256xf32, #tpu.memory_space<vmem>>, %arg5: memref<1x16x256xf32, #tpu.memory_space<vmem>>) attributes {dimension_semantics = [#tpu.dimension_semantics<parallel>, #tpu.dimension_semantics<parallel>, #tpu.dimension_semantics<parallel>], iteration_bounds = array<i64: 2, 1, 1>, scalar_prefetch = 0 : i64, scratch_operands = 0 : i64, tpu.core_type = #tpu.core_type<tc>, window_params = [{transform_indices = @transform_0, window_bounds = array<i64: 1, 16, 16>}, {transform_indices = @transform_1, window_bounds = array<i64: 1, 16, 256>}, {transform_indices = @transform_2, window_bounds = array<i64: 1, 16, 256>}]} {
    %c0 = arith.constant 0 : index
    %c0_0 = arith.constant 0 : index
    %c0_1 = arith.constant 0 : index
    %0 = vector.load %arg3[%c0, %c0_0, %c0_1] : memref<1x16x16xf32, #tpu.memory_space<vmem>>, vector<1x16x16xf32>
    %1 = vector.shape_cast %0 : vector<1x16x16xf32> to vector<16x16xf32>
    %c0_2 = arith.constant 0 : index
    %c0_3 = arith.constant 0 : index
    %c0_4 = arith.constant 0 : index
    %2 = vector.load %arg4[%c0_2, %c0_3, %c0_4] : memref<1x16x256xf32, #tpu.memory_space<vmem>>, vector<1x16x256xf32>
    %3 = vector.shape_cast %2 : vector<1x16x256xf32> to vector<16x256xf32>
    %cst = arith.constant dense<0.000000e+00> : vector<16x256xf32>
    %4 = tpu.matmul %1, %3, %cst {dimension_numbers = #tpu.dot_dimension_numbers<[1], [0], [0], [1], [0, 0, 1, 1], [], []>} : vector<16x16xf32>, vector<16x256xf32>, vector<16x256xf32> -> vector<16x256xf32>
    %c0_5 = arith.constant 0 : index
    %c0_6 = arith.constant 0 : index
    %c0_7 = arith.constant 0 : index
    %5 = vector.load %arg5[%c0_5, %c0_6, %c0_7] : memref<1x16x256xf32, #tpu.memory_space<vmem>>, vector<1x16x256xf32>
    %6 = vector.shape_cast %5 : vector<1x16x256xf32> to vector<16x256xf32>
    %7 = vector.shape_cast %4 : vector<16x256xf32> to vector<1x16x256xf32>
    tpu.vector_store %arg5[%c0_5, %c0_6, %c0_7], %7 {strides = array<i32>} : memref<1x16x256xf32, #tpu.memory_space<vmem>>, vector<1x16x256xf32>,
    return
  }
  func.func @transform_0(%arg0: i32, %arg1: i32, %arg2: i32) -> (i32, i32, i32) {
    %c0_i32 = arith.constant 0 : i32
    %c0_i32_0 = arith.constant 0 : i32
    return %arg0, %arg2, %c0_i32 : i32, i32, i32
  }
  func.func @transform_1(%arg0: i32, %arg1: i32, %arg2: i32) -> (i32, i32, i32) {
    %c0_i32 = arith.constant 0 : i32
    %c0_i32_0 = arith.constant 0 : i32
    return %arg0, %c0_i32, %arg1 : i32, i32, i32
  }
  func.func @transform_2(%arg0: i32, %arg1: i32, %arg2: i32) -> (i32, i32, i32) {
    %c0_i32 = arith.constant 0 : i32
    return %arg0, %arg2, %arg1 : i32, i32, i32
  }
}

</mosaic_0001>

<llo_original>
// kernel: tpu_custom_call.1
$region0: #{tpu_custom_call.1}
  #allocation0 [shape = 'u32[]', space=smem, size = 0x4, offset = 0x4, fixed_abs, tag = 'smem constant byte address 0x4 - core index']
  #allocation1 [shape = 'u32[144,128]{1,0:T(1,128)}', space=vmem, size = 0x12000, scoped, tag = 'internal scratch']
  %s0 = inlined_call_operand.hbm [shape: f32[2,16,16], index: 0, kind: input, shape index: {}]
  %s1 = inlined_call_operand.hbm [shape: f32[2,16,256], index: 1, kind: input, shape index: {}]
  %s2 = inlined_call_operand.hbm [shape: f32[2,16,256], index: 2, kind: output, shape index: {}]
  %s3 = sld [smem:[#allocation0]]
  $region49: #{tpu_custom_call.1} parent=0
    _
  %s5 = ssub.s32 1, %s3
  %s6 = scalar_select 0, %s5, %s3
  $region1: #{tpu_custom_call.1} parent=0
    #allocation2 [shape = 'u8[16384]{0}', space=vmem, size = 0x4000, scoped, tag = 'input window, operand 0']
    #allocation3 [shape = 's32[2]{0}', space=sflag, size = 0x8, scoped, tag = 'scoped memory for tpu_custom_call.1']
    #allocation4 [shape = 's32[2]{0}', space=sflag, size = 0x8, scoped, tag = 'scoped memory for tpu_custom_call.1']
    #allocation5 [shape = 'u8[32768]{0}', space=vmem, size = 0x8000, scoped, tag = 'input window, operand 1']
    #allocation6 [shape = 's32[2]{0}', space=sflag, size = 0x8, scoped, tag = 'scoped memory for tpu_custom_call.1']
    #allocation7 [shape = 'u8[32768]{0}', space=vmem, size = 0x8000, scoped, tag = 'output window, operand 0']
    %7 = vsyncpa [#allocation3], 0
    %s8 = scalar_lea.sflag [#allocation3], 1
    %9 = vsyncpa %s8, 0
    %10 = vsyncpa [#allocation6], 0
    %s11 = scalar_lea.sflag [#allocation6], 1
    %12 = vsyncpa %s11, 0
    %13 = vsyncpa [#allocation4], 0
    %s14 = scalar_lea.sflag [#allocation4], 1
    %15 = vsyncpa %s14, 0
    loop: start=0, step=1, limit=4
    $region2: #{tpu_custom_call.1} parent=1 // loop_pre_header
      _
    $region3: #{tpu_custom_call.1} parent=1 // loop_header
      %s17 = sphi 0, %s21
      %p18 = scmp.ge.s32.totalorder %s17, 4
      %s24 = sphi 0, %s43
      %s25 = sphi 0, %s39
      %s26 = sphi 0, %s35
      %s27 = sphi 0, %s24
      %s28 = sphi 0, %s25
      %s29 = sphi 0, %s26
      %s30 = sphi 0, %s27
      %s31 = sphi 0, %s28
      %s32 = sphi 0, %s29
      %s48 = sphi 0, %s50
      %s51 = sphi 0, %s48
      %s52 = sphi 0, %s51
      %s68 = sphi 0, %s52
      %s76 = sphi 0, %s78
      %s79 = sphi 0, %s76
      %s80 = sphi 0, %s79
      %s96 = sphi 0, %s80
      %s106 = sphi 0, %s108
      %s109 = sphi 0, %s106
      %s110 = sphi 0, %s109
      %s126 = sphi 0, %s110
    $region4: #{tpu_custom_call.1} parent=1 // loop_header_branch
      %20 = sbr.rel (%p18) target = $region8
    $region5: #{tpu_custom_call.1} parent=1 // loop_body
      %s22 = ssub.s32 %s17, 1
      %s23 = ssub.s32 %s17, 2
      %s33 = sadd.s32 1, %s26
      %p34 = scmp.ge.s32.totalorder %s33, 1
      %s35 = scalar_select %p34, 0, %s33
      %s36 = sadd.s32 1, %s25
      %s37 = scalar_select %p34, %s36, %s25
      %p38 = scmp.ge.s32.totalorder %s37, 1
      %s39 = scalar_select %p38, 0, %s37
      %s40 = sadd.s32 1, %s24
      %s41 = scalar_select %p38, %s40, %s24
      %p42 = scmp.ge.s32.totalorder %s41, 2
      %s43 = scalar_select %p42, 0, %s41
      %s44 = ssub.s32 %s24, %s43
      %s45 = ssub.s32 %s26, %s35
      %s46 = sor.u32 %s44, %s45
      %p47 = scmp.eq.s32.totalorder %s46, 0
      %s49 = sadd.s32 %s48, 1
      %s50 = scalar_select %p47, %s48, %s49
      %p53 = pneg %p47
      %p54 = scmp.eq.s32.totalorder %s17, 1
      %p55 = por %p53, %p54
      %p56 = scmp.ne.s32.totalorder %s48, %s51
      %p57 = scmp.eq.s32.totalorder %s17, 0
      %p58 = por %p56, %p57
      %p59 = scmp.ne.s32.totalorder %s48, %s51
      %p60 = scmp.eq.s32.totalorder %s22, 1
      %p61 = por %p59, %p60
      %p62 = scmp.ne.s32.totalorder %s51, %s52
      %p63 = scmp.eq.s32.totalorder %s22, 0
      %p64 = por %p62, %p63
      %p65 = scmp.ne.s32.totalorder %s51, %s52
      %p66 = scmp.eq.s32.totalorder %s23, 1
      %p67 = por %p65, %p66
      %p69 = scmp.ne.s32.totalorder %s52, %s68
      %p70 = scmp.eq.s32.totalorder %s23, 0
      %p71 = por %p69, %p70
      %s72 = ssub.s32 %s24, %s43
      %s73 = ssub.s32 %s25, %s39
      %s74 = sor.u32 %s72, %s73
      %p75 = scmp.eq.s32.totalorder %s74, 0
      %s77 = sadd.s32 %s76, 1
      %s78 = scalar_select %p75, %s76, %s77
      %p81 = pneg %p75
      %p82 = scmp.eq.s32.totalorder %s17, 1
      %p83 = por %p81, %p82
      %p84 = scmp.ne.s32.totalorder %s76, %s79
      %p85 = scmp.eq.s32.totalorder %s17, 0
      %p86 = por %p84, %p85
      %p87 = scmp.ne.s32.totalorder %s76, %s79
      %p88 = scmp.eq.s32.totalorder %s22, 1
      %p89 = por %p87, %p88
      %p90 = scmp.ne.s32.totalorder %s79, %s80
      %p91 = scmp.eq.s32.totalorder %s22, 0
      %p92 = por %p90, %p91
      %p93 = scmp.ne.s32.totalorder %s79, %s80
      %p94 = scmp.eq.s32.totalorder %s23, 1
      %p95 = por %p93, %p94
      %p97 = scmp.ne.s32.totalorder %s80, %s96
      %p98 = scmp.eq.s32.totalorder %s23, 0
      %p99 = por %p97, %p98
      %s100 = ssub.s32 %s24, %s43
      %s101 = ssub.s32 %s26, %s35
      %s102 = sor.u32 %s100, %s101
      %s103 = ssub.s32 %s25, %s39
      %s104 = sor.u32 %s102, %s103
      %p105 = scmp.eq.s32.totalorder %s104, 0
      %s107 = sadd.s32 %s106, 1
      %s108 = scalar_select %p105, %s106, %s107
      %p111 = pneg %p105
      %p112 = scmp.eq.s32.totalorder %s17, 1
      %p113 = por %p111, %p112
      %p114 = scmp.ne.s32.totalorder %s106, %s109
      %p115 = scmp.eq.s32.totalorder %s17, 0
      %p116 = por %p114, %p115
      %p117 = scmp.ne.s32.totalorder %s106, %s109
      %p118 = scmp.eq.s32.totalorder %s22, 1
      %p119 = por %p117, %p118
      %p120 = scmp.ne.s32.totalorder %s109, %s110
      %p121 = scmp.eq.s32.totalorder %s22, 0
      %p122 = por %p120, %p121
      %p123 = scmp.ne.s32.totalorder %s109, %s110
      %p124 = scmp.eq.s32.totalorder %s23, 1
      %p125 = por %p123, %p124
      %p127 = scmp.ne.s32.totalorder %s110, %s126
      %p128 = scmp.eq.s32.totalorder %s23, 0
      %p129 = por %p127, %p128
      %p130 = scmp.le.s32.totalorder 1, %s17
      %p131 = scmp.lt.s32.totalorder %s17, 3
      %p132 = pnand %p130, %p131
      %p133 = pneg %p132
      // Predicated region
      $region9: #{tpu_custom_call.1} parent=5 // pred_check
        _
      $region10: #{tpu_custom_call.1} parent=5 // pred_check_branch
        %135 = sbr.rel (%p132) target = $region12
      $region11: #{tpu_custom_call.1} parent=5 // pred_region
        %s136 = ssub.s32 %s17, 1
      $region12: #{tpu_custom_call.1} parent=5 // pred_fallthru
        _
      %p137 = scmp.lt.s32.totalorder %s17, 2
      // Predicated region
      $region13: #{tpu_custom_call.1} parent=5 // pred_check
        %p138 = pneg %p137
      $region14: #{tpu_custom_call.1} parent=5 // pred_check_branch
        %140 = sbr.rel (%p138) target = $region16
      $region15: #{tpu_custom_call.1} parent=5 // pred_region
        // Predicated region
        $region17: #{tpu_custom_call.1} parent=15 // pred_check
          %p141 = pneg %p58
        $region18: #{tpu_custom_call.1} parent=15 // pred_check_branch
          %143 = sbr.rel (%p141) target = $region20
        $region19: #{tpu_custom_call.1} parent=15 // pred_region
          %s144 = sand.u32 %s48, 1
          %s145 = scalar_lea.sflag [#allocation3], %s144
          %s146 = sand.u32 %s48, 1
          %s147 = smul.addr %s146, 16
          %s148 = scalar_lea.vmem [#allocation2], %s147
          %s149 = smul.u32 2, %s26
          %s151 = ssub.s32 256, 256
          %152 = vsyncadd %s145, %s151
          %s153 = smul.addr %s24, 2
          %s154 = sadd.s32 %s149, %s153
          %s155 = smul.addr %s154, 128
          %s156 = scalar_lea.hbm %s0, %s155
          %s157 = sshll.u32 %s148, 4
          %s158 = int_to_ptr.vmem [resolvable:$true] %s157
          %163 = dma.hbm_to_vmem [thread:$0]  %s156, 256, %s158, %s145, 128, 128, 8
        $region20: #{tpu_custom_call.1} parent=15 // pred_fallthru
          _
        // Predicated region
        $region21: #{tpu_custom_call.1} parent=15 // pred_check
          %p164 = pneg %p86
        $region22: #{tpu_custom_call.1} parent=15 // pred_check_branch
          %166 = sbr.rel (%p164) target = $region24
        $region23: #{tpu_custom_call.1} parent=15 // pred_region
          %s167 = sand.u32 %s76, 1
          %s168 = scalar_lea.sflag [#allocation6], %s167
          %s169 = sand.u32 %s76, 1
          %s170 = smul.addr %s169, 32
          %s171 = scalar_lea.vmem [#allocation5], %s170
          %s172 = smul.u32 2, %s25
          %s174 = ssub.s32 512, 512
          %175 = vsyncadd %s168, %s174
          %s176 = smul.addr %s24, 4
          %s177 = sadd.s32 %s172, %s176
          %s178 = smul.addr %s177, 128
          %s179 = scalar_lea.hbm %s1, %s178
          %s180 = sshll.u32 %s171, 4
          %s181 = int_to_ptr.vmem [resolvable:$true] %s180
          %186 = dma.hbm_to_vmem [thread:$0]  %s179, 512, %s181, %s168, 256, 256, 16
        $region24: #{tpu_custom_call.1} parent=15 // pred_fallthru
          _
      $region16: #{tpu_custom_call.1} parent=5 // pred_fallthru
        _
      %p187 = scmp.le.s32.totalorder 1, %s17
      %p188 = scmp.lt.s32.totalorder %s17, 3
      %p189 = pnand %p187, %p188
      %p190 = pneg %p189
      // Predicated region
      $region25: #{tpu_custom_call.1} parent=5 // pred_check
        _
      $region26: #{tpu_custom_call.1} parent=5 // pred_check_branch
        %192 = sbr.rel (%p189) target = $region28
      $region27: #{tpu_custom_call.1} parent=5 // pred_region
        %s193 = ssub.s32 %s17, 1
        %s194 = sand.u32 %s51, 1
        %s195 = scalar_lea.sflag [#allocation3], %s194
        %s196 = sand.u32 %s51, 1
        %s197 = smul.addr %s196, 16
        %s198 = scalar_lea.vmem [#allocation2], %s197
        // Predicated region
        $region29: #{tpu_custom_call.1} parent=27 // pred_check
          %p199 = pneg %p64
        $region30: #{tpu_custom_call.1} parent=27 // pred_check_branch
          %201 = sbr.rel (%p199) target = $region32
        $region31: #{tpu_custom_call.1} parent=27 // pred_region
          %202 = dma.done %s195, 256
        $region32: #{tpu_custom_call.1} parent=27 // pred_fallthru
          _
        %s203 = sand.u32 %s79, 1
        %s204 = scalar_lea.sflag [#allocation6], %s203
        %s205 = sand.u32 %s79, 1
        %s206 = smul.addr %s205, 32
        %s207 = scalar_lea.vmem [#allocation5], %s206
        // Predicated region
        $region33: #{tpu_custom_call.1} parent=27 // pred_check
          %p208 = pneg %p92
        $region34: #{tpu_custom_call.1} parent=27 // pred_check_branch
          %210 = sbr.rel (%p208) target = $region36
        $region35: #{tpu_custom_call.1} parent=27 // pred_region
          %211 = dma.done %s204, 512
        $region36: #{tpu_custom_call.1} parent=27 // pred_fallthru
          _
        %s212 = sand.u32 %s51, 1
        %s213 = scalar_lea.sflag [#allocation3], %s212
        %s214 = sand.u32 %s51, 1
        %s215 = smul.addr %s214, 16
        %s216 = scalar_lea.vmem [#allocation2], %s215
        %p217 = pneg %p64
        %p218 = pneg %p61
        %s219 = sand.u32 %s79, 1
        %s220 = scalar_lea.sflag [#allocation6], %s219
        %s221 = sand.u32 %s79, 1
        %s222 = smul.addr %s221, 32
        %s223 = scalar_lea.vmem [#allocation5], %s222
        %p224 = pneg %p92
        %p225 = pneg %p89
        %p226 = pneg %p122
        %p227 = pneg %p119
        %s228 = sand.u32 %s109, 1
        %s229 = scalar_lea.sflag [#allocation4], %s228
        %s230 = sand.u32 %s109, 1
        %s231 = smul.addr %s230, 32
        %s232 = scalar_lea.vmem [#allocation7], %s231
        %s233 = smul.u32 2, %s29
        %s234 = smul.u32 2, %s28
        %s235 = smul.u32 2, %s29
        %s236 = smul.u32 2, %s28
        %v237 = vld [vmem:[%s198] sm:$0xff]
        %v238 = vld [vmem:[%s198 + $0x8] sm:$0xff]
        %v239 = vld [vmem:[%s207] sm:$0xff]
        %v240 = vld [vmem:[%s207 + $0x8] sm:$0xff]
        %v241 = vld [vmem:[%s207 + $0x10] sm:$0xff]
        %v242 = vld [vmem:[%s207 + $0x18] sm:$0xff]
        %vm243 = vcmask 130048
        %v245 = vsel %vm243, %v237, 0
        %v248 = vsel %vm243, %v238, 0
        %250 = vmatprep.subr.mxu0 0.0
        %251 = vmatpush1.msra.mxu0 0.0
        %252 = vmatprep.subr.mxu0 0.0
        %253 = vmatpush1.msra.mxu0 0.0
        %254 = vmatprep.subr.mxu0 0.0
        %255 = vmatpush1.msra.mxu0 0.0
        %256 = vmatprep.subr.mxu0 0.0
        %257 = vmatpush1.msra.mxu0 0.0
        %258 = vmatprep.subr.mxu0 0.0
        %259 = vmatpush1.msra.mxu0 0.0
        %260 = vmatprep.subr.mxu0 0.0
        %261 = vmatpush1.msra.mxu0 0.0
        %262 = vmatprep.subr.mxu0 0.0
        %263 = vmatpush1.msra.mxu0 0.0
        %264 = vmatprep.subr.mxu0 0.0
        %265 = vmatpush1.msra.mxu0 0.0
        %266 = vmatprep.subr.mxu0 0.0
        %267 = vmatpush1.msra.mxu0 0.0
        %268 = vmatprep.subr.mxu0 0.0
        %269 = vmatpush1.msra.mxu0 0.0
        %270 = vmatprep.subr.mxu0 0.0
        %271 = vmatpush1.msra.mxu0 0.0
        %272 = vmatprep.subr.mxu0 0.0
        %273 = vmatpush1.msra.mxu0 0.0
        %274 = vmatprep.subr.mxu0 0.0
        %275 = vmatpush1.msra.mxu0 0.0
        %276 = vmatprep.subr.mxu0 0.0
        %277 = vmatpush1.msra.mxu0 0.0
        %278 = vmatprep.subr.mxu0 %v242
        %279 = vmatpush1.msra.mxu0 %v241
        %280 = vmatprep.subr.mxu0 %v240
        %281 = vmatpush1.msra.mxu0 %v239
        %282 = vmatprep.subr.mxu0 0.0
        %283 = vmatpush2.msra.mxu0 0.0
        %284 = vmatprep.subr.mxu0 0.0
        %285 = vmatpush2.msra.mxu0 0.0
        %286 = vmatprep.subr.mxu0 0.0
        %287 = vmatpush2.msra.mxu0 0.0
        %288 = vmatprep.subr.mxu0 0.0
        %289 = vmatpush2.msra.mxu0 0.0
        %290 = vmatprep.subr.mxu0 0.0
        %291 = vmatpush2.msra.mxu0 0.0
        %292 = vmatprep.subr.mxu0 0.0
        %293 = vmatpush2.msra.mxu0 0.0
        %294 = vmatprep.subr.mxu0 0.0
        %295 = vmatpush2.msra.mxu0 0.0
        %296 = vmatprep.subr.mxu0 0.0
        %297 = vmatpush2.msra.mxu0 0.0
        %298 = vmatprep.subr.mxu0 0.0
        %299 = vmatpush2.msra.mxu0 0.0
        %300 = vmatprep.subr.mxu0 0.0
        %301 = vmatpush2.msra.mxu0 0.0
        %302 = vmatprep.subr.mxu0 0.0
        %303 = vmatpush2.msra.mxu0 0.0
        %304 = vmatprep.subr.mxu0 0.0
        %305 = vmatpush2.msra.mxu0 0.0
        %306 = vmatprep.subr.mxu0 0.0
        %307 = vmatpush2.msra.mxu0 0.0
        %308 = vmatprep.subr.mxu0 0.0
        %309 = vmatpush2.msra.mxu0 0.0
        %310 = vmatprep.subr.mxu0 0.0
        %311 = vmatpush2.msra.mxu0 0.0
        %312 = vmatprep.subr.mxu0 0.0
        %313 = vmatpush2.msra.mxu0 0.0
        %314 = vmatprep.mubr.f32.mxu0 0.0
        %315 = vmatmul.mubr.f32.gmra.mxu0 %v245
        %v316 = vpop.f32.mrf.mxu0
        %v317 = vadd.f32 0.0, %v316
        %v318 = vpop.f32.mrf.mxu0
        %v319 = vadd.f32 0.0, %v318
        %320 = vmatprep.mubr.f32.mxu0 0.0
        %321 = vmatmul.mubr.f32.gmra.mxu0 %v248
        %v322 = vpop.f32.mrf.mxu0
        %v323 = vadd.f32 0.0, %v322
        %v324 = vpop.f32.mrf.mxu0
        %v325 = vadd.f32 0.0, %v324
        %326 = vdwg.mxu0
        %327 = vst [vmem:[%s232] sm:$0xff] %v317
        %328 = vst [vmem:[%s232 + $0x8] sm:$0xff] %v319
        %329 = vst [vmem:[%s232 + $0x10] sm:$0xff] %v323
        %330 = vst [vmem:[%s232 + $0x18] sm:$0xff] %v325
        %s331 = sand.u32 %s109, 1
        %s332 = scalar_lea.sflag [#allocation4], %s331
        %s333 = sand.u32 %s109, 1
        %s334 = smul.addr %s333, 32
        %s335 = scalar_lea.vmem [#allocation7], %s334
        // Predicated region
        $region37: #{tpu_custom_call.1} parent=27 // pred_check
          %p336 = pneg %p119
        $region38: #{tpu_custom_call.1} parent=27 // pred_check_branch
          %338 = sbr.rel (%p336) target = $region40
        $region39: #{tpu_custom_call.1} parent=27 // pred_region
          %s339 = smul.u32 2, %s29
          %s340 = smul.u32 2, %s28
          %s342 = ssub.s32 512, 512
          %343 = vsyncadd %s332, %s342
          %s344 = smul.addr %s339, 2
          %s345 = sadd.s32 %s340, %s344
          %s346 = smul.addr %s27, 4
          %s347 = sadd.s32 %s345, %s346
          %s348 = smul.addr %s347, 128
          %s349 = scalar_lea.hbm %s2, %s348
          %s350 = sshll.u32 %s335, 4
          %s351 = int_to_ptr.vmem [resolvable:$true] %s350
          %356 = dma.vmem_to_hbm [thread:$0]  %s351, 512, %s349, %s332, 256, 256, 16
        $region40: #{tpu_custom_call.1} parent=27 // pred_fallthru
          _
      $region28: #{tpu_custom_call.1} parent=5 // pred_fallthru
        _
      %p357 = scmp.le.s32.totalorder 2, %s17
      // Predicated region
      $region41: #{tpu_custom_call.1} parent=5 // pred_check
        %p358 = pneg %p357
      $region42: #{tpu_custom_call.1} parent=5 // pred_check_branch
        %360 = sbr.rel (%p358) target = $region44
      $region43: #{tpu_custom_call.1} parent=5 // pred_region
        %s361 = ssub.s32 %s17, 2
        // Predicated region
        $region45: #{tpu_custom_call.1} parent=43 // pred_check
          %p362 = pneg %p125
        $region46: #{tpu_custom_call.1} parent=43 // pred_check_branch
          %364 = sbr.rel (%p362) target = $region48
        $region47: #{tpu_custom_call.1} parent=43 // pred_region
          %s365 = sand.u32 %s110, 1
          %s366 = scalar_lea.sflag [#allocation4], %s365
          %s367 = sand.u32 %s110, 1
          %s368 = smul.addr %s367, 32
          %s369 = scalar_lea.vmem [#allocation7], %s368
          %370 = dma.done %s366, 512
        $region48: #{tpu_custom_call.1} parent=43 // pred_fallthru
          _
      $region44: #{tpu_custom_call.1} parent=5 // pred_fallthru
        _
    $region6: #{tpu_custom_call.1} parent=1 // loop_footer
      %s21 = sadd.s32 1, %s17
    $region7: #{tpu_custom_call.1} parent=1 // loop_footer_branch
      %16 = sbr.rel target = $region3
    $region8: #{tpu_custom_call.1} parent=1 // loop_exit
      _
    %371 = vsyncpa [#allocation3], 1
    %s372 = scalar_lea.sflag [#allocation3], 1
    %373 = vsyncpa %s372, 1
    %374 = vsyncpa [#allocation6], 1
    %s375 = scalar_lea.sflag [#allocation6], 1
    %376 = vsyncpa %s375, 1
    %377 = vsyncpa [#allocation4], 1
    %s378 = scalar_lea.sflag [#allocation4], 1
    %379 = vsyncpa %s378, 1

</llo_original>
